<compile_context>
chip_gen: v5e
topology: v5e:2x2
jax: 0.10.0
libtpu: 0.0.40
codegen_flags: <defaults>
</compile_context>

<pallas_src>
import functools

import jax
import jax.numpy as jnp
from jax.experimental import pallas as pl
from jax.experimental.pallas import tpu as pltpu


def _lmc_kernel(x_ref, t_ref, m_ref, onum_ref, oden_ref, *, cast_early: bool):
    # x_ref: (RT, V) log-probs in native dtype; t_ref/m_ref: (RT, 1).
    x = x_ref[...]
    if cast_early:
        # Pre-v6 chips have no bf16 VPU ops -> do the whole tile in f32.
        x = x.astype(jnp.float32)
    tgt = t_ref[...]                                    # (RT, 1) int32
    msk = m_ref[...]                                    # (RT, 1) f32

    # "gather" along vocab via one-hot compare + lane reduction (TPU friendly).
    # Exact in the native dtype: only one addend per row is nonzero.
    col = jax.lax.broadcasted_iota(jnp.int32, x.shape, 1)                   # (RT, V)
    picked = jnp.sum(jnp.where(col == tgt, x, 0.0), axis=1, keepdims=True)  # (RT, 1)
    picked = picked.astype(jnp.float32)

    # Mask-SELECT (not just multiply): the ragged tail block of the unpadded
    # logits stream contains garbage rows, and NaN/Inf * 0 would poison a
    # plain multiply.  Multiplying by msk inside the select preserves the
    # reference semantics for non-binary masks.
    nll = jnp.where(msk > 0.0, -picked * msk, 0.0)      # (RT, 1)

    # Per-tile partials; the (tiny) cross-tile sum + divide happens in the wrapper.
    onum_ref[...] = jnp.sum(nll, axis=0, keepdims=True)[None]   # (1, 1, 1)
    oden_ref[...] = jnp.sum(msk, axis=0, keepdims=True)[None]   # (1, 1, 1)


def _device_kind():
    try:
        return jax.devices()[0].device_kind.lower()
    except Exception:
        return ""


def _chip_params():
    """(cast_early, target_block_bytes, vmem_limit_bytes) per TPU generation."""
    kind = _device_kind()
    is_v7 = ("v7" in kind) or ("tpu7" in kind) or ("7x" in kind)
    pre_v6 = any(t in kind for t in ("v2", "v3", "v4", "v5"))
    if is_v7:
        # 64 MiB per-TC VMEM: smaller blocks, conservative scoped limit.
        return pre_v6, 4 << 20, 48 * 1024 * 1024
    # v5e / v6e (128 MiB VMEM) and unknown chips.
    return pre_v6, 6 << 20, 64 * 1024 * 1024


def _pick_row_tile(rows, V, itemsize, target_bytes, max_rows=1024):
    """Row tile sized so the widest in-kernel temporary (int32 iota/compare,
    4 B/elem) stays near target_bytes; rounded to the dtype's sublane packing."""
    sub = max(8, 32 // max(1, itemsize))        # f32 -> 8, bf16 -> 16, int8 -> 32
    per_row = max(1, V * 4)                     # budget in int32-intermediate width
    rt = max(sub, min(max_rows, target_bytes // per_row))
    rt = max(sub, (rt // sub) * sub)
    if rows <= rt:
        return rows                             # single full block (always legal)
    return rt


def language_model_criterion(inp, target, mask, *, block_bytes=None):
    """inp: (B, T, V) float (f32 or bf16) log-probs; target: (B, Tm) int;
    mask: (B, Tm) float.  Returns scalar f32."""
    B, T, V = inp.shape
    target = target[:, :T].astype(jnp.int32).reshape(B * T, 1)
    mask = mask[:, :T].astype(jnp.float32).reshape(B * T, 1)
    x = inp.reshape(B * T, V)                   # native dtype; layout-free reshape

    rows = B * T
    itemsize = jnp.dtype(inp.dtype).itemsize
    cast_early, auto_block_bytes, vmem_limit = _chip_params()
    target_bytes = auto_block_bytes if block_bytes is None else block_bytes

    row_tile = _pick_row_tile(rows, V, itemsize, target_bytes)
    num_tiles = pl.cdiv(rows, row_tile)
    rows_pad = num_tiles * row_tile

    # Pad ONLY the tiny target/mask arrays (zero-mask padding keeps the math
    # exact); the large logits array is streamed unpadded -- the ragged tail
    # block is neutralized in-kernel via the mask-select.
    pad = rows_pad - rows
    if pad:
        target = jnp.pad(target, ((0, pad), (0, 0)))
        mask = jnp.pad(mask, ((0, pad), (0, 0)))

    cost = pl.CostEstimate(
        flops=3 * rows * V,                      # compare + select + add per element
        transcendentals=0,
        bytes_accessed=rows * V * itemsize       # logits stream (dominant)
        + rows_pad * (4 + 4)                     # target + mask
        + num_tiles * 8,                         # per-tile partial outputs
    )

    # Deeper pipelining on the logits stream when the grid is deep enough.
    x_spec_kwargs = {}
    if num_tiles >= 3:
        x_spec_kwargs["pipeline_mode"] = pl.Buffered(3)
    x_spec = pl.BlockSpec((row_tile, V), lambda i: (i, 0), **x_spec_kwargs)

    # TODO(synk): for very large vocabularies (V >~ 128k) add a lane-tiled V grid
    # axis so blocks fit v7x's 64 MiB VMEM even at the minimum sublane tile.
    num_parts, den_parts = pl.pallas_call(
        functools.partial(_lmc_kernel, cast_early=cast_early),
        out_shape=(
            jax.ShapeDtypeStruct((num_tiles, 1, 1), jnp.float32),
            jax.ShapeDtypeStruct((num_tiles, 1, 1), jnp.float32),
        ),
        grid_spec=pltpu.PrefetchScalarGridSpec(
            num_scalar_prefetch=0,
            grid=(num_tiles,),
            in_specs=[
                x_spec,
                pl.BlockSpec((row_tile, 1), lambda i: (i, 0)),
                pl.BlockSpec((row_tile, 1), lambda i: (i, 0)),
            ],
            out_specs=[
                pl.BlockSpec((1, 1, 1), lambda i: (i, 0, 0)),
                pl.BlockSpec((1, 1, 1), lambda i: (i, 0, 0)),
            ],
        ),
        compiler_params=pltpu.CompilerParams(
            dimension_semantics=("parallel",),   # independent tiles -> both TCs on v7x
            vmem_limit_bytes=vmem_limit,
        ),
        cost_estimate=cost,
    )(x, target, mask)

    # Tiny final reductions / divide (free vs. the logits stream).
    return jnp.sum(num_parts) / jnp.sum(den_parts)


def _reference(inp, target, mask):
    T = inp.shape[1]
    target = target[:, :T].astype(jnp.int32)
    mask = mask[:, :T].astype(jnp.float32)
    x = inp.astype(jnp.float32)
    picked = jnp.take_along_axis(x, target[..., None], axis=2)[..., 0]
    return jnp.sum(-picked * mask) / jnp.sum(mask)


if __name__ == "__main__":
    key = jax.random.PRNGKey(0)

    # Case 1: f32 log-probs, single full block, binary mask.
    B, T, V = 2, 8, 32
    Tm = 10                      # target/mask longer than T -> exercises slicing
    k1, k2, k3 = jax.random.split(key, 3)
    logits = jax.random.normal(k1, (B, T, V), dtype=jnp.float32)
    logprobs = jax.nn.log_softmax(logits, axis=-1)
    target = jax.random.randint(k2, (B, Tm), 0, V, dtype=jnp.int32)
    mask = (jax.random.uniform(k3, (B, Tm)) > 0.3).astype(jnp.float32)
    mask = mask.at[0, 0].set(1.0)   # guarantee non-zero mask sum

    out = jax.block_until_ready(language_model_criterion(logprobs, target, mask))
    ref = _reference(logprobs, target, mask)
    assert jnp.allclose(out, ref, atol=1e-5, rtol=1e-5), (out, ref)

    # Case 2: bf16 log-probs (native-dtype gather) + rows not a sublane multiple.
    B2, T2, V2, Tm2 = 3, 5, 40, 7
    k4, k5, k6 = jax.random.split(jax.random.PRNGKey(1), 3)
    logits2 = jax.random.normal(k4, (B2, T2, V2), dtype=jnp.float32)
    logprobs2 = jax.nn.log_softmax(logits2, axis=-1).astype(jnp.bfloat16)
    target2 = jax.random.randint(k5, (B2, Tm2), 0, V2, dtype=jnp.int32)
    mask2 = (jax.random.uniform(k6, (B2, Tm2)) > 0.3).astype(jnp.float32)
    mask2 = mask2.at[0, 0].set(1.0)

    out2 = jax.block_until_ready(language_model_criterion(logprobs2, target2, mask2))
    ref2 = _reference(logprobs2, target2, mask2)
    assert jnp.allclose(out2, ref2, atol=1e-4, rtol=1e-4), (out2, ref2)

    # Case 3: bf16 + multi-tile grid with a ragged tail block (no logits pad),
    # fractional (non-binary) mask, Buffered(3) pipeline path.  A small
    # block_bytes override forces several grid steps at this tiny size.
    B3, T3, V3, Tm3 = 4, 37, 128, 40
    k7, k8, k9, k10 = jax.random.split(jax.random.PRNGKey(2), 4)
    logits3 = jax.random.normal(k7, (B3, T3, V3), dtype=jnp.float32)
    logprobs3 = jax.nn.log_softmax(logits3, axis=-1).astype(jnp.bfloat16)
    target3 = jax.random.randint(k8, (B3, Tm3), 0, V3, dtype=jnp.int32)
    keep3 = jax.random.uniform(k9, (B3, Tm3)) > 0.25
    frac3 = jax.random.uniform(k10, (B3, Tm3)) * 0.9 + 0.1
    mask3 = jnp.where(keep3, frac3, 0.0).astype(jnp.float32)
    mask3 = mask3.at[0, 0].set(1.0)

    out3 = jax.block_until_ready(
        language_model_criterion(logprobs3, target3, mask3, block_bytes=32768))
    ref3 = _reference(logprobs3, target3, mask3)
    assert jnp.allclose(out3, ref3, atol=1e-4, rtol=1e-4), (out3, ref3)

    print("KERNEL_OK")
</pallas_src>

<mosaic_0001>
module attributes {stable_mosaic.version = 11 : i64} {
  func.func @_lmc_kernel(%arg0: i32, %arg1: memref<16x32xf32, #tpu.memory_space<vmem>>, %arg2: memref<16x1xi32, #tpu.memory_space<vmem>>, %arg3: memref<16x1xf32, #tpu.memory_space<vmem>>, %arg4: memref<1x1x1xf32, #tpu.memory_space<vmem>>, %arg5: memref<1x1x1xf32, #tpu.memory_space<vmem>>) attributes {dimension_semantics = [#tpu.dimension_semantics<parallel>], iteration_bounds = array<i64: 1>, scalar_prefetch = 0 : i64, scratch_operands = 0 : i64, tpu.core_type = #tpu.core_type<tc>, window_params = [{transform_indices = @transform_0, window_bounds = array<i64: 16, 32>}, {transform_indices = @transform_1, window_bounds = array<i64: 16, 1>}, {transform_indices = @transform_2, window_bounds = array<i64: 16, 1>}, {transform_indices = @transform_3, window_bounds = array<i64: 1, 1, 1>}, {transform_indices = @transform_4, window_bounds = array<i64: 1, 1, 1>}]} {
    %c0 = arith.constant 0 : index
    %c0_0 = arith.constant 0 : index
    %0 = vector.load %arg1[%c0, %c0_0] : memref<16x32xf32, #tpu.memory_space<vmem>>, vector<16x32xf32>
    %c0_1 = arith.constant 0 : index
    %c0_2 = arith.constant 0 : index
    %1 = vector.load %arg2[%c0_1, %c0_2] : memref<16x1xi32, #tpu.memory_space<vmem>>, vector<16x1xi32>
    %c0_3 = arith.constant 0 : index
    %c0_4 = arith.constant 0 : index
    %2 = vector.load %arg3[%c0_3, %c0_4] : memref<16x1xf32, #tpu.memory_space<vmem>>, vector<16x1xf32>
    %3 = tpu.iota {dimensions = array<i32: 1>} : vector<16x32xi32>
    %4 = vector.broadcast %1 : vector<16x1xi32> to vector<16x32xi32>
    %5 = arith.cmpi eq, %3, %4 : vector<16x32xi32>
    %cst = arith.constant 0.000000e+00 : f32
    %6 = vector.broadcast %cst : f32 to vector<16x32xf32>
    %7 = arith.select %5, %0, %6 : vector<16x32xi1>, vector<16x32xf32>
    %cst_5 = arith.constant dense<0.000000e+00> : vector<16xf32>
    %8 = vector.multi_reduction <add>, %7, %cst_5 [1] : vector<16x32xf32> to vector<16xf32>
    %9 = vector.shape_cast %8 : vector<16xf32> to vector<16x1xf32>
    %cst_6 = arith.constant 0.000000e+00 : f32
    %10 = vector.broadcast %cst_6 : f32 to vector<16x1xf32>
    %11 = arith.cmpf ogt, %2, %10 : vector<16x1xf32>
    %cst_7 = arith.constant 0.000000e+00 : f32
    %12 = vector.broadcast %cst_7 : f32 to vector<16x1xf32>
    %13 = arith.subf %12, %9 : vector<16x1xf32>
    %14 = arith.mulf %13, %2 : vector<16x1xf32>
    %cst_8 = arith.constant 0.000000e+00 : f32
    %15 = vector.broadcast %cst_8 : f32 to vector<16x1xf32>
    %16 = arith.select %11, %14, %15 : vector<16x1xi1>, vector<16x1xf32>
    %cst_9 = arith.constant dense<0.000000e+00> : vector<1xf32>
    %17 = vector.multi_reduction <add>, %16, %cst_9 [0] : vector<16x1xf32> to vector<1xf32>
    %18 = vector.shape_cast %17 : vector<1xf32> to vector<1x1xf32>
    %19 = vector.shape_cast %18 : vector<1x1xf32> to vector<1x1x1xf32>
    %c0_10 = arith.constant 0 : index
    %c0_11 = arith.constant 0 : index
    %c0_12 = arith.constant 0 : index
    %20 = vector.load %arg4[%c0_10, %c0_11, %c0_12] : memref<1x1x1xf32, #tpu.memory_space<vmem>>, vector<1x1x1xf32>
    tpu.vector_store %arg4[%c0_10, %c0_11, %c0_12], %19 {strides = array<i32>} : memref<1x1x1xf32, #tpu.memory_space<vmem>>, vector<1x1x1xf32>,
    %cst_13 = arith.constant dense<0.000000e+00> : vector<1xf32>
    %21 = vector.multi_reduction <add>, %2, %cst_13 [0] : vector<16x1xf32> to vector<1xf32>
    %22 = vector.shape_cast %21 : vector<1xf32> to vector<1x1xf32>
    %23 = vector.shape_cast %22 : vector<1x1xf32> to vector<1x1x1xf32>
    %c0_14 = arith.constant 0 : index
    %c0_15 = arith.constant 0 : index
    %c0_16 = arith.constant 0 : index
    %24 = vector.load %arg5[%c0_14, %c0_15, %c0_16] : memref<1x1x1xf32, #tpu.memory_space<vmem>>, vector<1x1x1xf32>
    tpu.vector_store %arg5[%c0_14, %c0_15, %c0_16], %23 {strides = array<i32>} : memref<1x1x1xf32, #tpu.memory_space<vmem>>, vector<1x1x1xf32>,
    return
  }
  func.func @transform_0(%arg0: i32) -> (i32, i32) {
    %c0_i32 = arith.constant 0 : i32
    %c0_i32_0 = arith.constant 0 : i32
    return %arg0, %c0_i32 : i32, i32
  }
  func.func @transform_1(%arg0: i32) -> (i32, i32) {
    %c0_i32 = arith.constant 0 : i32
    %c0_i32_0 = arith.constant 0 : i32
    return %arg0, %c0_i32 : i32, i32
  }
  func.func @transform_2(%arg0: i32) -> (i32, i32) {
    %c0_i32 = arith.constant 0 : i32
    %c0_i32_0 = arith.constant 0 : i32
    return %arg0, %c0_i32 : i32, i32
  }
  func.func @transform_3(%arg0: i32) -> (i32, i32, i32) {
    %c0_i32 = arith.constant 0 : i32
    %c0_i32_0 = arith.constant 0 : i32
    %c0_i32_1 = arith.constant 0 : i32
    return %arg0, %c0_i32, %c0_i32_0 : i32, i32, i32
  }
  func.func @transform_4(%arg0: i32) -> (i32, i32, i32) {
    %c0_i32 = arith.constant 0 : i32
    %c0_i32_0 = arith.constant 0 : i32
    %c0_i32_1 = arith.constant 0 : i32
    return %arg0, %c0_i32, %c0_i32_0 : i32, i32, i32
  }
}

</mosaic_0001>

<llo_original>
// kernel: tpu_custom_call.1
$region0: #{tpu_custom_call.1}
  #allocation0 [shape = 'u32[]', space=smem, size = 0x4, offset = 0x4, fixed_abs, tag = 'smem constant byte address 0x4 - core index']
  #allocation1 [shape = 'u32[72,128]{1,0:T(1,128)}', space=vmem, size = 0x9000, scoped, tag = 'internal scratch']
  %s0 = inlined_call_operand.vmem [shape: f32[16,32], index: 0, kind: input, shape index: {}]
  %s1 = inlined_call_operand.vmem [shape: s32[16,1], index: 1, kind: input, shape index: {}]
  %s2 = inlined_call_operand.vmem [shape: f32[16,1], index: 2, kind: input, shape index: {}]
  %s3 = inlined_call_operand.hbm [shape: f32[1,1,1], index: 3, kind: output, shape index: {0}]
  %s4 = inlined_call_operand.hbm [shape: f32[1,1,1], index: 4, kind: output, shape index: {1}]
  %5 = xla_tuple %s3, %s4
  %s6 = sld [smem:[#allocation0]]
  $region30: #{tpu_custom_call.1} parent=0
    _
  %s8 = ssub.s32 1, %s6
  %s9 = scalar_select 0, %s8, %s6
  $region1: #{tpu_custom_call.1} parent=0
    #allocation2 [shape = 'u8[512]{0}', space=vmem, size = 0x400, scoped, tag = 'output window, operand 0, single buffered']
    #allocation3 [shape = 's32[1]{0}', space=sflag, size = 0x4, scoped, tag = 'scoped memory for tpu_custom_call.1']
    #allocation4 [shape = 'u8[512]{0}', space=vmem, size = 0x400, scoped, tag = 'output window, operand 1, single buffered']
    #allocation5 [shape = 's32[1]{0}', space=sflag, size = 0x4, scoped, tag = 'scoped memory for tpu_custom_call.1']
    %10 = vsyncpa [#allocation3], 0
    %11 = vsyncpa [#allocation5], 0
    // Predicated region
    $region2: #{tpu_custom_call.1} parent=1 // pred_check
      _
    $region3: #{tpu_custom_call.1} parent=1 // pred_check_branch
      %13 = sbr.rel (0) target = $region5
    $region4: #{tpu_custom_call.1} parent=1 // pred_region
      _
    $region5: #{tpu_custom_call.1} parent=1 // pred_fallthru
      _
    // Predicated region
    $region6: #{tpu_custom_call.1} parent=1 // pred_check
      _
    $region7: #{tpu_custom_call.1} parent=1 // pred_check_branch
      %15 = sbr.rel (0) target = $region9
    $region8: #{tpu_custom_call.1} parent=1 // pred_region
      _
    $region9: #{tpu_custom_call.1} parent=1 // pred_fallthru
      _
    // Predicated region
    $region10: #{tpu_custom_call.1} parent=1 // pred_check
      _
    $region11: #{tpu_custom_call.1} parent=1 // pred_check_branch
      %17 = sbr.rel (0) target = $region13
    $region12: #{tpu_custom_call.1} parent=1 // pred_region
      _
    $region13: #{tpu_custom_call.1} parent=1 // pred_fallthru
      _
    %v18 = vld [vmem:[%s0] sm:$0xff]
    %v19 = vld [vmem:[%s0 + $0x8] sm:$0xff]
    %v20 = vld [vmem:[%s1] sm:$0xff]
    %v21 = vld [vmem:[%s1 + $0x8] sm:$0xff]
    %v22 = vld [vmem:[%s2] sm:$0xff]
    %v23 = vld [vmem:[%s2 + $0x8] sm:$0xff]
    %v24 = vlaneseq
    %v25 = vand.u32 %v24, 127
    %26 = vset.pattern.permute.xlu0 0
    %27 = vperm.xlu0 %26, %v20
    %v28 = vpop.permute.xlu0 %27
    %29 = vset.pattern.permute.xlu0 0
    %30 = vperm.xlu0 %29, %v21
    %v31 = vpop.permute.xlu0 %30
    %vm32 = vcmp.eq.s32.totalorder %v25, %v28
    %vm33 = vcmp.eq.s32.totalorder %v25, %v31
    %v34 = vsel %vm32, %v18, 0.0
    %v35 = vsel %vm33, %v19, 0.0
    %vm36 = vcmask 261120
    %v37 = vsel %vm36, %v34, 0.0
    %38 = vadd.xlane.f32.xlu0 %v37
    %v39 = vpop.xlane.xlu0 %38
    %v40 = vsel %vm36, %v35, 0.0
    %41 = vadd.xlane.f32.xlu0 %v40
    %v42 = vpop.xlane.xlu0 %41
    %vm43 = vcmp.gt.f32.partialorder %v22, 0.0
    %vm44 = vcmp.gt.f32.partialorder %v23, 0.0
    %v45 = vsub.f32 0.0, %v39
    %v46 = vsub.f32 0.0, %v42
    %v47 = vmul.f32 %v45, %v22
    %v48 = vmul.f32 %v46, %v23
    %v49 = vsel %vm43, %v47, 0.0
    %v50 = vsel %vm44, %v48, 0.0
    %vm51 = vcmask 7168
    %v52 = vsel %vm51, %v49, 0.0
    %v53 = vsel %vm51, %v50, 0.0
    %v54 = vadd.f32 %v52, %v53
    %v55 = vrot.slane %v54, 4
    %v56 = vadd.f32 %v54, %v55
    %v57 = vrot.slane %v56, 2
    %v58 = vadd.f32 %v56, %v57
    %v59 = vrot.slane %v58, 1
    %v60 = vadd.f32 %v58, %v59
    %vm61 = vcmask 0
    %62 = vst.msk [vmem:[#allocation2] sm:$0x1] %vm61, %v60
    %v63 = vsel %vm51, %v22, 0.0
    %v64 = vsel %vm51, %v23, 0.0
    %v65 = vadd.f32 %v63, %v64
    %v66 = vrot.slane %v65, 4
    %v67 = vadd.f32 %v65, %v66
    %v68 = vrot.slane %v67, 2
    %v69 = vadd.f32 %v67, %v68
    %v70 = vrot.slane %v69, 1
    %v71 = vadd.f32 %v69, %v70
    %72 = vst.msk [vmem:[#allocation4] sm:$0x1] %vm61, %v71
    // Predicated region
    $region14: #{tpu_custom_call.1} parent=1 // pred_check
      _
    $region15: #{tpu_custom_call.1} parent=1 // pred_check_branch
      %74 = sbr.rel (0) target = $region17
    $region16: #{tpu_custom_call.1} parent=1 // pred_region
      %76 = vsyncadd [#allocation3], 0
      %s78 = sshll.u32 [#allocation2], 4
      %s79 = int_to_ptr.vmem [resolvable:$true] %s78
      %s80 = sshll.u32 %s3, 4
      %s81 = int_to_ptr.hbm [resolvable:$true] %s80
      %83 = dma.vmem_to_hbm [thread:$0]  %s79, 16, %s81, [#allocation3]
    $region17: #{tpu_custom_call.1} parent=1 // pred_fallthru
      _
    // Predicated region
    $region18: #{tpu_custom_call.1} parent=1 // pred_check
      _
    $region19: #{tpu_custom_call.1} parent=1 // pred_check_branch
      %85 = sbr.rel (0) target = $region21
    $region20: #{tpu_custom_call.1} parent=1 // pred_region
      %87 = vsyncadd [#allocation5], 0
      %s89 = sshll.u32 [#allocation4], 4
      %s90 = int_to_ptr.vmem [resolvable:$true] %s89
      %s91 = sshll.u32 %s4, 4
      %s92 = int_to_ptr.hbm [resolvable:$true] %s91
      %94 = dma.vmem_to_hbm [thread:$0]  %s90, 16, %s92, [#allocation5]
    $region21: #{tpu_custom_call.1} parent=1 // pred_fallthru
      _
    // Predicated region
    $region22: #{tpu_custom_call.1} parent=1 // pred_check
      _
    $region23: #{tpu_custom_call.1} parent=1 // pred_check_branch
      %96 = sbr.rel (0) target = $region25
    $region24: #{tpu_custom_call.1} parent=1 // pred_region
      %98 = dma.done [#allocation3], 16
    $region25: #{tpu_custom_call.1} parent=1 // pred_fallthru
      _
    // Predicated region
    $region26: #{tpu_custom_call.1} parent=1 // pred_check
      _
    $region27: #{tpu_custom_call.1} parent=1 // pred_check_branch
      %100 = sbr.rel (0) target = $region29
    $region28: #{tpu_custom_call.1} parent=1 // pred_region
      %102 = dma.done [#allocation5], 16
    $region29: #{tpu_custom_call.1} parent=1 // pred_fallthru
      _
    %103 = vsyncpa [#allocation3], 1
    %104 = vsyncpa [#allocation5], 1

</llo_original>
